<compile_context>
chip_gen: v7x
topology: tpu7x:2x2x1
jax: 0.10.0
libtpu: 0.0.40
codegen_flags: <defaults>
</compile_context>

<pallas_src>
import functools

import jax
import jax.numpy as jnp
from jax.experimental import pallas as pl
from jax.experimental.pallas import tpu as pltpu


def _round_up(n, m):
    return ((n + m - 1) // m) * m


def _lstm_lightweight_kernel(x_ref, w_in_ref, w_lstm_ref, misc_ref, out_ref, pre_ref,
                             *, seq_len, batch_pad, hidden, input_size, output_size):
    """Full forward pass for one (padded) batch.

    Shapes (all float32):
      x_ref:      (S*Bp, In)     time-major input, rows (t*Bp + b), batch zero-padded to Bp
      w_in_ref:   (In+1, H)      rows 0..In-1: linear_in weight^T, row In: linear_in bias
      w_lstm_ref: (2H, 4H)       rows 0..H-1: weight_ih_l0^T, rows H..2H-1: weight_hh_l0^T
                                 (gate order i, f, g, o)
      misc_ref:   (Out+2, 4H)    row 0: b_ih+b_hh; rows 1..Out: linear_out weight rows
                                 (padded to 4H lanes); row Out+1: linear_out bias (padded)
      out_ref:    (Bp, Out)
      pre_ref:    (S*Bp, 4H)     VMEM scratch: hoisted x-side gate pre-activations
    """
    S, Bp, H, In, Out = seq_len, batch_pad, hidden, input_size, output_size

    # ---- unpack fused small operands (one-time, off the recurrent chain) ------------
    w_in = w_in_ref[0:In, :]                # (In, H)
    b_in = w_in_ref[In:In + 1, :]           # (1, H)
    w_ih_t = w_lstm_ref[0:H, :]             # (H, 4H)   sublane-aligned split (H % 8 == 0)
    w_hh_t = w_lstm_ref[H:2 * H, :]         # (H, 4H)
    b_lstm = misc_ref[0:1, :]               # (1, 4H)   b_ih + b_hh

    x_all = x_ref[...]                      # (S*Bp, In)

    # ---- hoisted, non-recurrent path (off the serial chain) -------------------------
    if In == 1:
        # (S*Bp, 1) * (1, H): outer product -> VPU broadcast multiply-add, no MXU.
        xh = x_all * w_in + b_in
    else:
        xh = jnp.dot(x_all, w_in, preferred_element_type=jnp.float32) + b_in
    xh = jnp.maximum(xh, 0.0)               # ReLU, (S*Bp, H)

    # x-side gate pre-activations for ALL timesteps, biases folded in; stored to VMEM
    # scratch so the recurrence only keeps one (Bp, 4H) tile live per step.
    pre_ref[...] = (jnp.dot(xh, w_ih_t, preferred_element_type=jnp.float32) + b_lstm)

    # ---- recurrence: h/c live in vregs; per-step work is one small MXU dot + VPU/EUP -
    def cell(g_pre, h, c):
        gates = g_pre + jnp.dot(h, w_hh_t, preferred_element_type=jnp.float32)  # (Bp,4H)
        # Two full-width transcendentals (1 vreg each) instead of four sliced ones.
        sig = jax.nn.sigmoid(gates)
        th = jnp.tanh(gates)
        # PyTorch gate order: input, forget, cell(g), output.
        i_g = sig[:, 0 * H:1 * H]
        f_g = sig[:, 1 * H:2 * H]
        g_g = th[:, 2 * H:3 * H]
        o_g = sig[:, 3 * H:4 * H]
        c_new = f_g * c + i_g * g_g
        h_new = o_g * jnp.tanh(c_new)
        return h_new, c_new

    # h_0 = c_0 = 0 (PyTorch default when no initial state is passed).
    h = jnp.zeros((Bp, H), jnp.float32)
    c = jnp.zeros((Bp, H), jnp.float32)

    if S <= 32:
        # Small S: static unroll, static 8-row-aligned slices (free whole-tile views).
        for t in range(S):
            h, c = cell(pre_ref[t * Bp:(t + 1) * Bp, :], h, c)
    else:
        # Large S: bounded vreg pressure / code size, modest unroll for LLO visibility.
        def body(t, carry):
            hh, cc = carry
            row = pl.multiple_of(t * Bp, Bp)                 # Bp is a multiple of 8
            return cell(pre_ref[pl.ds(row, Bp), :], hh, cc)
        h, c = jax.lax.fori_loop(0, S, body, (h, c), unroll=8)

    # ---- x = h_n[-1]; dropout is identity in eval mode; then linear_out --------------
    # TODO(synk): training-mode dropout (Bernoulli masking) not implemented; eval semantics used.
    if Out == 1:
        w_out_row = misc_ref[1:2, 0:H]                       # (1, H)
        b_out = misc_ref[2:3, 0:1]                           # (1, 1)
        # VPU multiply + lane reduction: avoids an MXU push/pop for a tiny result.
        out_ref[...] = jnp.sum(h * w_out_row, axis=-1, keepdims=True) + b_out
    else:
        w_out = misc_ref[1:1 + Out, 0:H]                     # (Out, H)
        b_out = misc_ref[1 + Out:2 + Out, 0:Out]             # (1, Out)
        out_ref[...] = (jax.lax.dot_general(
            h, w_out, dimension_numbers=(((1,), (1,)), ((), ())),
            preferred_element_type=jnp.float32) + b_out)


def lstm_lightweight_forward(x, params):
    """x: (batch, seq, input_size) float32 -> (batch,) for output_size == 1."""
    B, S, In = x.shape
    H = params["w_hh"].shape[1]
    Out = params["w_out"].shape[0]
    G = 4 * H
    Bp = _round_up(max(B, 8), 8)            # sublane-aligned batch (review item)

    # time-major, batch zero-padded to Bp, flattened rows (t*Bp + b)
    x_tm = jnp.transpose(x.astype(jnp.float32), (1, 0, 2))           # (S, B, In)
    x_tm = jnp.pad(x_tm, ((0, 0), (0, Bp - B), (0, 0)))              # (S, Bp, In)
    x_flat = x_tm.reshape(S * Bp, In)

    # Fused operand arrays (cuts input DMA count 8 -> 4).
    w_in_b = jnp.concatenate(
        [params["w_in"].T.astype(jnp.float32),
         params["b_in"].reshape(1, H).astype(jnp.float32)], axis=0)  # (In+1, H)
    w_lstm_t = jnp.concatenate(
        [params["w_ih"].T.astype(jnp.float32),
         params["w_hh"].T.astype(jnp.float32)], axis=0)              # (2H, 4H)
    b_lstm = (params["b_ih"] + params["b_hh"]).astype(jnp.float32)   # (4H,)
    misc = jnp.zeros((Out + 2, G), jnp.float32)
    misc = misc.at[0, :].set(b_lstm)
    misc = misc.at[1:1 + Out, :H].set(params["w_out"].astype(jnp.float32))
    misc = misc.at[1 + Out, :Out].set(params["b_out"].astype(jnp.float32))

    kernel = functools.partial(_lstm_lightweight_kernel,
                               seq_len=S, batch_pad=Bp, hidden=H,
                               input_size=In, output_size=Out)

    vmem = pl.BlockSpec(memory_space=pltpu.MemorySpace.VMEM)
    # NOTE: at these shapes everything (x, pre_gates scratch, weights) is a few KiB of
    # VMEM, so a single grid-less program is the right call.  For large B one would add
    # a batch grid axis with dimension_semantics=("parallel",) (2 TCs on v7x), and for
    # very long S a sequence grid axis marked "arbitrary" carrying h/c in scratch.
    out = pl.pallas_call(
        kernel,
        out_shape=jax.ShapeDtypeStruct((Bp, Out), jnp.float32),
        in_specs=[vmem] * 4,
        out_specs=vmem,
        scratch_shapes=[pltpu.VMEM((S * Bp, G), jnp.float32)],
    )(x_flat, w_in_b, w_lstm_t, misc)

    out = out[:B]                                                    # drop padded rows
    # out.squeeze(-1): only squeezes when output_size == 1 (torch semantics)
    return out[:, 0] if Out == 1 else out


def init_params(key, input_size=1, hidden_size=16, output_size=1):
    """Deterministic parameter init mirroring the module's __init__ / init_weights()."""
    H, In, Out = hidden_size, input_size, output_size
    ks = jax.random.split(key, 6)

    lim_in = 1.0 / jnp.sqrt(jnp.float32(In))
    w_in = jax.random.uniform(ks[0], (H, In), jnp.float32, -lim_in, lim_in)
    b_in = jax.random.uniform(ks[1], (H,), jnp.float32, -lim_in, lim_in)

    # LSTM init per init_weights(): weight_ih kaiming-normal, weight_hh orthogonal, biases 0
    w_ih = jax.random.normal(ks[2], (4 * H, H), jnp.float32) * jnp.sqrt(2.0 / H)
    q, _ = jnp.linalg.qr(jax.random.normal(ks[3], (4 * H, H), jnp.float32))
    w_hh = q                                                         # (4H, H) orthonormal cols
    b_ih = jnp.zeros((4 * H,), jnp.float32)
    b_hh = jnp.zeros((4 * H,), jnp.float32)

    lim_out = 1.0 / jnp.sqrt(jnp.float32(H))
    w_out = jax.random.uniform(ks[4], (Out, H), jnp.float32, -lim_out, lim_out)
    b_out = jax.random.uniform(ks[5], (Out,), jnp.float32, -lim_out, lim_out)

    return dict(w_in=w_in, b_in=b_in, w_ih=w_ih, w_hh=w_hh,
                b_ih=b_ih, b_hh=b_hh, w_out=w_out, b_out=b_out)


def reference_forward(x, params):
    """Pure-JAX reference mirroring the PyTorch forward (eval mode)."""
    H = params["w_hh"].shape[1]
    xh = jnp.maximum(x @ params["w_in"].T + params["b_in"], 0.0)     # (B, S, H)
    B, S, _ = xh.shape
    h = jnp.zeros((B, H), jnp.float32)
    c = jnp.zeros((B, H), jnp.float32)
    for t in range(S):
        gates = (xh[:, t] @ params["w_ih"].T + params["b_ih"]
                 + h @ params["w_hh"].T + params["b_hh"])
        i = jax.nn.sigmoid(gates[:, 0 * H:1 * H])
        f = jax.nn.sigmoid(gates[:, 1 * H:2 * H])
        g = jnp.tanh(gates[:, 2 * H:3 * H])
        o = jax.nn.sigmoid(gates[:, 3 * H:4 * H])
        c = f * c + i * g
        h = o * jnp.tanh(c)
    out = h @ params["w_out"].T + params["b_out"]
    return out[..., 0]


if __name__ == "__main__":
    B, S, In, H, Out = 2, 8, 1, 16, 1
    key = jax.random.PRNGKey(0)
    k_x, k_p = jax.random.split(key)

    x = jax.random.normal(k_x, (B, S, In), jnp.float32)
    params = init_params(k_p, input_size=In, hidden_size=H, output_size=Out)

    fwd = jax.jit(lstm_lightweight_forward)
    out = fwd(x, params)
    out = jax.block_until_ready(out)

    ref = reference_forward(x, params)
    assert out.shape == (B,), out.shape
    assert jnp.allclose(out, ref, atol=1e-5, rtol=1e-5), (out, ref)

    print("KERNEL_OK")
</pallas_src>

<mosaic_0001>
module attributes {stable_mosaic.version = 11 : i64} {
  func.func @_lstm_lightweight_kernel(%arg0: memref<64x1xf32, #tpu.memory_space<vmem>>, %arg1: memref<2x16xf32, #tpu.memory_space<vmem>>, %arg2: memref<32x64xf32, #tpu.memory_space<vmem>>, %arg3: memref<3x64xf32, #tpu.memory_space<vmem>>, %arg4: memref<8x1xf32, #tpu.memory_space<vmem>>, %arg5: memref<64x64xf32, #tpu.memory_space<vmem>>) attributes {dimension_semantics = [], scalar_prefetch = 0 : i64, scratch_operands = 1 : i64, tpu.core_type = #tpu.core_type<tc>} {
    %c0 = arith.constant 0 : index
    %c0_0 = arith.constant 0 : index
    %0 = vector.load %arg1[%c0, %c0_0] : memref<2x16xf32, #tpu.memory_space<vmem>>, vector<1x16xf32>
    %c1 = arith.constant 1 : index
    %c0_1 = arith.constant 0 : index
    %1 = vector.load %arg1[%c1, %c0_1] : memref<2x16xf32, #tpu.memory_space<vmem>>, vector<1x16xf32>
    %c0_2 = arith.constant 0 : index
    %c0_3 = arith.constant 0 : index
    %2 = vector.load %arg2[%c0_2, %c0_3] : memref<32x64xf32, #tpu.memory_space<vmem>>, vector<16x64xf32>
    %c16 = arith.constant 16 : index
    %c0_4 = arith.constant 0 : index
    %3 = vector.load %arg2[%c16, %c0_4] : memref<32x64xf32, #tpu.memory_space<vmem>>, vector<16x64xf32>
    %c0_5 = arith.constant 0 : index
    %c0_6 = arith.constant 0 : index
    %4 = vector.load %arg3[%c0_5, %c0_6] : memref<3x64xf32, #tpu.memory_space<vmem>>, vector<1x64xf32>
    %c0_7 = arith.constant 0 : index
    %c0_8 = arith.constant 0 : index
    %5 = vector.load %arg0[%c0_7, %c0_8] : memref<64x1xf32, #tpu.memory_space<vmem>>, vector<64x1xf32>
    %6 = vector.broadcast %5 : vector<64x1xf32> to vector<64x16xf32>
    %7 = vector.broadcast %0 : vector<1x16xf32> to vector<64x16xf32>
    %8 = arith.mulf %6, %7 : vector<64x16xf32>
    %9 = vector.broadcast %1 : vector<1x16xf32> to vector<64x16xf32>
    %10 = arith.addf %8, %9 : vector<64x16xf32>
    %cst = arith.constant 0.000000e+00 : f32
    %11 = vector.broadcast %cst : f32 to vector<64x16xf32>
    %12 = arith.maximumf %10, %11 : vector<64x16xf32>
    %cst_9 = arith.constant dense<0.000000e+00> : vector<64x64xf32>
    %13 = tpu.matmul %12, %2, %cst_9 {dimension_numbers = #tpu.dot_dimension_numbers<[1], [0], [0], [1], [0, 0, 1, 1], [], []>} : vector<64x16xf32>, vector<16x64xf32>, vector<64x64xf32> -> vector<64x64xf32>
    %14 = vector.broadcast %4 : vector<1x64xf32> to vector<64x64xf32>
    %15 = arith.addf %13, %14 : vector<64x64xf32>
    %c0_10 = arith.constant 0 : index
    %c0_11 = arith.constant 0 : index
    %16 = vector.load %arg5[%c0_10, %c0_11] : memref<64x64xf32, #tpu.memory_space<vmem>>, vector<64x64xf32>
    tpu.vector_store %arg5[%c0_10, %c0_11], %15 {strides = array<i32>} : memref<64x64xf32, #tpu.memory_space<vmem>>, vector<64x64xf32>,
    %cst_12 = arith.constant 0.000000e+00 : f32
    %17 = vector.broadcast %cst_12 : f32 to vector<8x16xf32>
    %cst_13 = arith.constant 0.000000e+00 : f32
    %18 = vector.broadcast %cst_13 : f32 to vector<8x16xf32>
    %c0_14 = arith.constant 0 : index
    %c0_15 = arith.constant 0 : index
    %19 = vector.load %arg5[%c0_14, %c0_15] : memref<64x64xf32, #tpu.memory_space<vmem>>, vector<8x64xf32>
    %cst_16 = arith.constant dense<0.000000e+00> : vector<8x64xf32>
    %20 = tpu.matmul %17, %3, %cst_16 {dimension_numbers = #tpu.dot_dimension_numbers<[1], [0], [0], [1], [0, 0, 1, 1], [], []>} : vector<8x16xf32>, vector<16x64xf32>, vector<8x64xf32> -> vector<8x64xf32>
    %21 = arith.addf %19, %20 : vector<8x64xf32>
    %22 = arith.negf %21 : vector<8x64xf32>
    %23 = math.exp %22 : vector<8x64xf32>
    %cst_17 = arith.constant 1.000000e+00 : f32
    %24 = vector.broadcast %cst_17 : f32 to vector<8x64xf32>
    %25 = arith.addf %24, %23 : vector<8x64xf32>
    %26 = arith.divf %24, %25 : vector<8x64xf32>
    %27 = math.tanh %21 : vector<8x64xf32>
    %28 = vector.extract_strided_slice %26 {offsets = [0, 0], sizes = [8, 16], strides = [1, 1]} : vector<8x64xf32> to vector<8x16xf32>
    %29 = vector.extract_strided_slice %26 {offsets = [0, 16], sizes = [8, 16], strides = [1, 1]} : vector<8x64xf32> to vector<8x16xf32>
    %30 = vector.extract_strided_slice %27 {offsets = [0, 32], sizes = [8, 16], strides = [1, 1]} : vector<8x64xf32> to vector<8x16xf32>
    %31 = vector.extract_strided_slice %26 {offsets = [0, 48], sizes = [8, 16], strides = [1, 1]} : vector<8x64xf32> to vector<8x16xf32>
    %32 = arith.mulf %29, %18 : vector<8x16xf32>
    %33 = arith.mulf %28, %30 : vector<8x16xf32>
    %34 = arith.addf %32, %33 : vector<8x16xf32>
    %35 = math.tanh %34 : vector<8x16xf32>
    %36 = arith.mulf %31, %35 : vector<8x16xf32>
    %c8 = arith.constant 8 : index
    %c0_18 = arith.constant 0 : index
    %37 = vector.load %arg5[%c8, %c0_18] : memref<64x64xf32, #tpu.memory_space<vmem>>, vector<8x64xf32>
    %cst_19 = arith.constant dense<0.000000e+00> : vector<8x64xf32>
    %38 = tpu.matmul %36, %3, %cst_19 {dimension_numbers = #tpu.dot_dimension_numbers<[1], [0], [0], [1], [0, 0, 1, 1], [], []>} : vector<8x16xf32>, vector<16x64xf32>, vector<8x64xf32> -> vector<8x64xf32>
    %39 = arith.addf %37, %38 : vector<8x64xf32>
    %40 = arith.negf %39 : vector<8x64xf32>
    %41 = math.exp %40 : vector<8x64xf32>
    %cst_20 = arith.constant 1.000000e+00 : f32
    %42 = vector.broadcast %cst_20 : f32 to vector<8x64xf32>
    %43 = arith.addf %42, %41 : vector<8x64xf32>
    %44 = arith.divf %42, %43 : vector<8x64xf32>
    %45 = math.tanh %39 : vector<8x64xf32>
    %46 = vector.extract_strided_slice %44 {offsets = [0, 0], sizes = [8, 16], strides = [1, 1]} : vector<8x64xf32> to vector<8x16xf32>
    %47 = vector.extract_strided_slice %44 {offsets = [0, 16], sizes = [8, 16], strides = [1, 1]} : vector<8x64xf32> to vector<8x16xf32>
    %48 = vector.extract_strided_slice %45 {offsets = [0, 32], sizes = [8, 16], strides = [1, 1]} : vector<8x64xf32> to vector<8x16xf32>
    %49 = vector.extract_strided_slice %44 {offsets = [0, 48], sizes = [8, 16], strides = [1, 1]} : vector<8x64xf32> to vector<8x16xf32>
    %50 = arith.mulf %47, %34 : vector<8x16xf32>
    %51 = arith.mulf %46, %48 : vector<8x16xf32>
    %52 = arith.addf %50, %51 : vector<8x16xf32>
    %53 = math.tanh %52 : vector<8x16xf32>
    %54 = arith.mulf %49, %53 : vector<8x16xf32>
    %c16_21 = arith.constant 16 : index
    %c0_22 = arith.constant 0 : index
    %55 = vector.load %arg5[%c16_21, %c0_22] : memref<64x64xf32, #tpu.memory_space<vmem>>, vector<8x64xf32>
    %cst_23 = arith.constant dense<0.000000e+00> : vector<8x64xf32>
    %56 = tpu.matmul %54, %3, %cst_23 {dimension_numbers = #tpu.dot_dimension_numbers<[1], [0], [0], [1], [0, 0, 1, 1], [], []>} : vector<8x16xf32>, vector<16x64xf32>, vector<8x64xf32> -> vector<8x64xf32>
    %57 = arith.addf %55, %56 : vector<8x64xf32>
    %58 = arith.negf %57 : vector<8x64xf32>
    %59 = math.exp %58 : vector<8x64xf32>
    %cst_24 = arith.constant 1.000000e+00 : f32
    %60 = vector.broadcast %cst_24 : f32 to vector<8x64xf32>
    %61 = arith.addf %60, %59 : vector<8x64xf32>
    %62 = arith.divf %60, %61 : vector<8x64xf32>
    %63 = math.tanh %57 : vector<8x64xf32>
    %64 = vector.extract_strided_slice %62 {offsets = [0, 0], sizes = [8, 16], strides = [1, 1]} : vector<8x64xf32> to vector<8x16xf32>
    %65 = vector.extract_strided_slice %62 {offsets = [0, 16], sizes = [8, 16], strides = [1, 1]} : vector<8x64xf32> to vector<8x16xf32>
    %66 = vector.extract_strided_slice %63 {offsets = [0, 32], sizes = [8, 16], strides = [1, 1]} : vector<8x64xf32> to vector<8x16xf32>
    %67 = vector.extract_strided_slice %62 {offsets = [0, 48], sizes = [8, 16], strides = [1, 1]} : vector<8x64xf32> to vector<8x16xf32>
    %68 = arith.mulf %65, %52 : vector<8x16xf32>
    %69 = arith.mulf %64, %66 : vector<8x16xf32>
    %70 = arith.addf %68, %69 : vector<8x16xf32>
    %71 = math.tanh %70 : vector<8x16xf32>
    %72 = arith.mulf %67, %71 : vector<8x16xf32>
    %c24 = arith.constant 24 : index
    %c0_25 = arith.constant 0 : index
    %73 = vector.load %arg5[%c24, %c0_25] : memref<64x64xf32, #tpu.memory_space<vmem>>, vector<8x64xf32>
    %cst_26 = arith.constant dense<0.000000e+00> : vector<8x64xf32>
    %74 = tpu.matmul %72, %3, %cst_26 {dimension_numbers = #tpu.dot_dimension_numbers<[1], [0], [0], [1], [0, 0, 1, 1], [], []>} : vector<8x16xf32>, vector<16x64xf32>, vector<8x64xf32> -> vector<8x64xf32>
    %75 = arith.addf %73, %74 : vector<8x64xf32>
    %76 = arith.negf %75 : vector<8x64xf32>
    %77 = math.exp %76 : vector<8x64xf32>
    %cst_27 = arith.constant 1.000000e+00 : f32
    %78 = vector.broadcast %cst_27 : f32 to vector<8x64xf32>
    %79 = arith.addf %78, %77 : vector<8x64xf32>
    %80 = arith.divf %78, %79 : vector<8x64xf32>
    %81 = math.tanh %75 : vector<8x64xf32>
    %82 = vector.extract_strided_slice %80 {offsets = [0, 0], sizes = [8, 16], strides = [1, 1]} : vector<8x64xf32> to vector<8x16xf32>
    %83 = vector.extract_strided_slice %80 {offsets = [0, 16], sizes = [8, 16], strides = [1, 1]} : vector<8x64xf32> to vector<8x16xf32>
    %84 = vector.extract_strided_slice %81 {offsets = [0, 32], sizes = [8, 16], strides = [1, 1]} : vector<8x64xf32> to vector<8x16xf32>
    %85 = vector.extract_strided_slice %80 {offsets = [0, 48], sizes = [8, 16], strides = [1, 1]} : vector<8x64xf32> to vector<8x16xf32>
    %86 = arith.mulf %83, %70 : vector<8x16xf32>
    %87 = arith.mulf %82, %84 : vector<8x16xf32>
    %88 = arith.addf %86, %87 : vector<8x16xf32>
    %89 = math.tanh %88 : vector<8x16xf32>
    %90 = arith.mulf %85, %89 : vector<8x16xf32>
    %c32 = arith.constant 32 : index
    %c0_28 = arith.constant 0 : index
    %91 = vector.load %arg5[%c32, %c0_28] : memref<64x64xf32, #tpu.memory_space<vmem>>, vector<8x64xf32>
    %cst_29 = arith.constant dense<0.000000e+00> : vector<8x64xf32>
    %92 = tpu.matmul %90, %3, %cst_29 {dimension_numbers = #tpu.dot_dimension_numbers<[1], [0], [0], [1], [0, 0, 1, 1], [], []>} : vector<8x16xf32>, vector<16x64xf32>, vector<8x64xf32> -> vector<8x64xf32>
    %93 = arith.addf %91, %92 : vector<8x64xf32>
    %94 = arith.negf %93 : vector<8x64xf32>
    %95 = math.exp %94 : vector<8x64xf32>
    %cst_30 = arith.constant 1.000000e+00 : f32
    %96 = vector.broadcast %cst_30 : f32 to vector<8x64xf32>
    %97 = arith.addf %96, %95 : vector<8x64xf32>
    %98 = arith.divf %96, %97 : vector<8x64xf32>
    %99 = math.tanh %93 : vector<8x64xf32>
    %100 = vector.extract_strided_slice %98 {offsets = [0, 0], sizes = [8, 16], strides = [1, 1]} : vector<8x64xf32> to vector<8x16xf32>
    %101 = vector.extract_strided_slice %98 {offsets = [0, 16], sizes = [8, 16], strides = [1, 1]} : vector<8x64xf32> to vector<8x16xf32>
    %102 = vector.extract_strided_slice %99 {offsets = [0, 32], sizes = [8, 16], strides = [1, 1]} : vector<8x64xf32> to vector<8x16xf32>
    %103 = vector.extract_strided_slice %98 {offsets = [0, 48], sizes = [8, 16], strides = [1, 1]} : vector<8x64xf32> to vector<8x16xf32>
    %104 = arith.mulf %101, %88 : vector<8x16xf32>
    %105 = arith.mulf %100, %102 : vector<8x16xf32>
    %106 = arith.addf %104, %105 : vector<8x16xf32>
    %107 = math.tanh %106 : vector<8x16xf32>
    %108 = arith.mulf %103, %107 : vector<8x16xf32>
    %c40 = arith.constant 40 : index
    %c0_31 = arith.constant 0 : index
    %109 = vector.load %arg5[%c40, %c0_31] : memref<64x64xf32, #tpu.memory_space<vmem>>, vector<8x64xf32>
    %cst_32 = arith.constant dense<0.000000e+00> : vector<8x64xf32>
    %110 = tpu.matmul %108, %3, %cst_32 {dimension_numbers = #tpu.dot_dimension_numbers<[1], [0], [0], [1], [0, 0, 1, 1], [], []>} : vector<8x16xf32>, vector<16x64xf32>, vector<8x64xf32> -> vector<8x64xf32>
    %111 = arith.addf %109, %110 : vector<8x64xf32>
    %112 = arith.negf %111 : vector<8x64xf32>
    %113 = math.exp %112 : vector<8x64xf32>
    %cst_33 = arith.constant 1.000000e+00 : f32
    %114 = vector.broadcast %cst_33 : f32 to vector<8x64xf32>
    %115 = arith.addf %114, %113 : vector<8x64xf32>
    %116 = arith.divf %114, %115 : vector<8x64xf32>
    %117 = math.tanh %111 : vector<8x64xf32>
    %118 = vector.extract_strided_slice %116 {offsets = [0, 0], sizes = [8, 16], strides = [1, 1]} : vector<8x64xf32> to vector<8x16xf32>
    %119 = vector.extract_strided_slice %116 {offsets = [0, 16], sizes = [8, 16], strides = [1, 1]} : vector<8x64xf32> to vector<8x16xf32>
    %120 = vector.extract_strided_slice %117 {offsets = [0, 32], sizes = [8, 16], strides = [1, 1]} : vector<8x64xf32> to vector<8x16xf32>
    %121 = vector.extract_strided_slice %116 {offsets = [0, 48], sizes = [8, 16], strides = [1, 1]} : vector<8x64xf32> to vector<8x16xf32>
    %122 = arith.mulf %119, %106 : vector<8x16xf32>
    %123 = arith.mulf %118, %120 : vector<8x16xf32>
    %124 = arith.addf %122, %123 : vector<8x16xf32>
    %125 = math.tanh %124 : vector<8x16xf32>
    %126 = arith.mulf %121, %125 : vector<8x16xf32>
    %c48 = arith.constant 48 : index
    %c0_34 = arith.constant 0 : index
    %127 = vector.load %arg5[%c48, %c0_34] : memref<64x64xf32, #tpu.memory_space<vmem>>, vector<8x64xf32>
    %cst_35 = arith.constant dense<0.000000e+00> : vector<8x64xf32>
    %128 = tpu.matmul %126, %3, %cst_35 {dimension_numbers = #tpu.dot_dimension_numbers<[1], [0], [0], [1], [0, 0, 1, 1], [], []>} : vector<8x16xf32>, vector<16x64xf32>, vector<8x64xf32> -> vector<8x64xf32>
    %129 = arith.addf %127, %128 : vector<8x64xf32>
    %130 = arith.negf %129 : vector<8x64xf32>
    %131 = math.exp %130 : vector<8x64xf32>
    %cst_36 = arith.constant 1.000000e+00 : f32
    %132 = vector.broadcast %cst_36 : f32 to vector<8x64xf32>
    %133 = arith.addf %132, %131 : vector<8x64xf32>
    %134 = arith.divf %132, %133 : vector<8x64xf32>
    %135 = math.tanh %129 : vector<8x64xf32>
    %136 = vector.extract_strided_slice %134 {offsets = [0, 0], sizes = [8, 16], strides = [1, 1]} : vector<8x64xf32> to vector<8x16xf32>
    %137 = vector.extract_strided_slice %134 {offsets = [0, 16], sizes = [8, 16], strides = [1, 1]} : vector<8x64xf32> to vector<8x16xf32>
    %138 = vector.extract_strided_slice %135 {offsets = [0, 32], sizes = [8, 16], strides = [1, 1]} : vector<8x64xf32> to vector<8x16xf32>
    %139 = vector.extract_strided_slice %134 {offsets = [0, 48], sizes = [8, 16], strides = [1, 1]} : vector<8x64xf32> to vector<8x16xf32>
    %140 = arith.mulf %137, %124 : vector<8x16xf32>
    %141 = arith.mulf %136, %138 : vector<8x16xf32>
    %142 = arith.addf %140, %141 : vector<8x16xf32>
    %143 = math.tanh %142 : vector<8x16xf32>
    %144 = arith.mulf %139, %143 : vector<8x16xf32>
    %c56 = arith.constant 56 : index
    %c0_37 = arith.constant 0 : index
    %145 = vector.load %arg5[%c56, %c0_37] : memref<64x64xf32, #tpu.memory_space<vmem>>, vector<8x64xf32>
    %cst_38 = arith.constant dense<0.000000e+00> : vector<8x64xf32>
    %146 = tpu.matmul %144, %3, %cst_38 {dimension_numbers = #tpu.dot_dimension_numbers<[1], [0], [0], [1], [0, 0, 1, 1], [], []>} : vector<8x16xf32>, vector<16x64xf32>, vector<8x64xf32> -> vector<8x64xf32>
    %147 = arith.addf %145, %146 : vector<8x64xf32>
    %148 = arith.negf %147 : vector<8x64xf32>
    %149 = math.exp %148 : vector<8x64xf32>
    %cst_39 = arith.constant 1.000000e+00 : f32
    %150 = vector.broadcast %cst_39 : f32 to vector<8x64xf32>
    %151 = arith.addf %150, %149 : vector<8x64xf32>
    %152 = arith.divf %150, %151 : vector<8x64xf32>
    %153 = math.tanh %147 : vector<8x64xf32>
    %154 = vector.extract_strided_slice %152 {offsets = [0, 0], sizes = [8, 16], strides = [1, 1]} : vector<8x64xf32> to vector<8x16xf32>
    %155 = vector.extract_strided_slice %152 {offsets = [0, 16], sizes = [8, 16], strides = [1, 1]} : vector<8x64xf32> to vector<8x16xf32>
    %156 = vector.extract_strided_slice %153 {offsets = [0, 32], sizes = [8, 16], strides = [1, 1]} : vector<8x64xf32> to vector<8x16xf32>
    %157 = vector.extract_strided_slice %152 {offsets = [0, 48], sizes = [8, 16], strides = [1, 1]} : vector<8x64xf32> to vector<8x16xf32>
    %158 = arith.mulf %155, %142 : vector<8x16xf32>
    %159 = arith.mulf %154, %156 : vector<8x16xf32>
    %160 = arith.addf %158, %159 : vector<8x16xf32>
    %161 = math.tanh %160 : vector<8x16xf32>
    %162 = arith.mulf %157, %161 : vector<8x16xf32>
    %c1_40 = arith.constant 1 : index
    %c0_41 = arith.constant 0 : index
    %163 = vector.load %arg3[%c1_40, %c0_41] : memref<3x64xf32, #tpu.memory_space<vmem>>, vector<1x16xf32>
    %c2 = arith.constant 2 : index
    %c0_42 = arith.constant 0 : index
    %164 = vector.load %arg3[%c2, %c0_42] : memref<3x64xf32, #tpu.memory_space<vmem>>, vector<1x1xf32>
    %165 = vector.broadcast %163 : vector<1x16xf32> to vector<8x16xf32>
    %166 = arith.mulf %162, %165 : vector<8x16xf32>
    %cst_43 = arith.constant dense<0.000000e+00> : vector<8xf32>
    %167 = vector.multi_reduction <add>, %166, %cst_43 [1] : vector<8x16xf32> to vector<8xf32>
    %168 = vector.shape_cast %167 : vector<8xf32> to vector<8x1xf32>
    %169 = vector.broadcast %164 : vector<1x1xf32> to vector<8x1xf32>
    %170 = arith.addf %168, %169 : vector<8x1xf32>
    %c0_44 = arith.constant 0 : index
    %c0_45 = arith.constant 0 : index
    %171 = vector.load %arg4[%c0_44, %c0_45] : memref<8x1xf32, #tpu.memory_space<vmem>>, vector<8x1xf32>
    tpu.vector_store %arg4[%c0_44, %c0_45], %170 {strides = array<i32>} : memref<8x1xf32, #tpu.memory_space<vmem>>, vector<8x1xf32>,
    return
  }
}

</mosaic_0001>

<llo_original>
// kernel: lstm_lightweight_forward.1
$region0: #{lstm_lightweight_forward.1}
  #allocation0 [shape = 'u32[]', space=smem, size = 0x4, offset = 0x4, fixed_abs, tag = 'smem constant byte address 0x4 - core index']
  #allocation1 [shape = 'u32[144,128]{1,0:T(1,128)}', space=vmem, size = 0x12000, scoped, tag = 'internal scratch']
  #allocation2 [shape = 'f32[64,64]{1,0:T(8,128)}', space=vmem, size = 0x8000, scoped, tag = 'scratch operand']
  %s0 = inlined_call_operand.vmem [shape: f32[64,1], index: 0, kind: input, shape index: {}]
  %s1 = inlined_call_operand.vmem [shape: f32[2,16], index: 1, kind: input, shape index: {}]
  %s2 = inlined_call_operand.vmem [shape: f32[32,64], index: 2, kind: input, shape index: {}]
  %s3 = inlined_call_operand.vmem [shape: f32[3,64], index: 3, kind: input, shape index: {}]
  %s4 = inlined_call_operand.vmem [shape: f32[8,1], index: 4, kind: output, shape index: {}]
  %s5 = sld [smem:[#allocation0]]
  $region26: #{lstm_lightweight_forward.1} parent=0
    _
  %s7 = ssub.s32 1, %s5
  %s8 = scalar_select 0, %s7, %s5
  // Predicated region
  $region2: #{lstm_lightweight_forward.1} parent=0 // pred_check
    _
  $region3: #{lstm_lightweight_forward.1} parent=0 // pred_check_branch
    %10 = sbr.rel (0) target = $region5
  $region4: #{lstm_lightweight_forward.1} parent=0 // pred_region
    _
  $region5: #{lstm_lightweight_forward.1} parent=0 // pred_fallthru
    _
  // Predicated region
  $region6: #{lstm_lightweight_forward.1} parent=0 // pred_check
    _
  $region7: #{lstm_lightweight_forward.1} parent=0 // pred_check_branch
    %12 = sbr.rel (0) target = $region9
  $region8: #{lstm_lightweight_forward.1} parent=0 // pred_region
    _
  $region9: #{lstm_lightweight_forward.1} parent=0 // pred_fallthru
    _
  // Predicated region
  $region10: #{lstm_lightweight_forward.1} parent=0 // pred_check
    _
  $region11: #{lstm_lightweight_forward.1} parent=0 // pred_check_branch
    %14 = sbr.rel (0) target = $region13
  $region12: #{lstm_lightweight_forward.1} parent=0 // pred_region
    _
  $region13: #{lstm_lightweight_forward.1} parent=0 // pred_fallthru
    _
  // Predicated region
  $region14: #{lstm_lightweight_forward.1} parent=0 // pred_check
    _
  $region15: #{lstm_lightweight_forward.1} parent=0 // pred_check_branch
    %16 = sbr.rel (0) target = $region17
  $region16: #{lstm_lightweight_forward.1} parent=0 // pred_region
    _
  $region17: #{lstm_lightweight_forward.1} parent=0 // pred_fallthru
    _
  %v17 = vld [vmem:[%s1] sm:$0x1]
  %v18 = vld [vmem:[%s1 + $0x1] sm:$0x1]
  %v19 = vld [vmem:[%s2] sm:$0xff]
  %v20 = vld [vmem:[%s2 + $0x8] sm:$0xff]
  %v21 = vld [vmem:[%s2 + $0x10] sm:$0xff]
  %v22 = vld [vmem:[%s2 + $0x18] sm:$0xff]
  %v23 = vld [vmem:[%s3] sm:$0x1]
  %v24 = vld [vmem:[%s0] sm:$0xff]
  %v25 = vld [vmem:[%s0 + $0x8] sm:$0xff]
  %v26 = vld [vmem:[%s0 + $0x10] sm:$0xff]
  %v27 = vld [vmem:[%s0 + $0x18] sm:$0xff]
  %v28 = vld [vmem:[%s0 + $0x20] sm:$0xff]
  %v29 = vld [vmem:[%s0 + $0x28] sm:$0xff]
  %v30 = vld [vmem:[%s0 + $0x30] sm:$0xff]
  %v31 = vld [vmem:[%s0 + $0x38] sm:$0xff]
  %33 = vset.pattern.permute.xlu0 0
  %34 = vperm.xlu0 %33, %v24
  %v35 = vpop.permute.xlu0 %34
  %38 = vset.pattern.permute.xlu0 0
  %39 = vperm.xlu0 %38, %v25
  %v40 = vpop.permute.xlu0 %39
  %43 = vset.pattern.permute.xlu0 0
  %44 = vperm.xlu0 %43, %v26
  %v45 = vpop.permute.xlu0 %44
  %48 = vset.pattern.permute.xlu0 0
  %49 = vperm.xlu0 %48, %v27
  %v50 = vpop.permute.xlu0 %49
  %53 = vset.pattern.permute.xlu0 0
  %54 = vperm.xlu0 %53, %v28
  %v55 = vpop.permute.xlu0 %54
  %58 = vset.pattern.permute.xlu0 0
  %59 = vperm.xlu0 %58, %v29
  %v60 = vpop.permute.xlu0 %59
  %63 = vset.pattern.permute.xlu0 0
  %64 = vperm.xlu0 %63, %v30
  %v65 = vpop.permute.xlu0 %64
  %68 = vset.pattern.permute.xlu0 0
  %69 = vperm.xlu0 %68, %v31
  %v70 = vpop.permute.xlu0 %69
  %v72 = vlaneseq
  %v73 = vshrl.u32 %v72, 7
  %v74 = vsub.s32 0, %v73
  %v75 = vrot.slane %v17, %v74
  %v76 = vmul.f32 %v35, %v75
  %v77 = vmul.f32 %v40, %v75
  %v78 = vmul.f32 %v45, %v75
  %v79 = vmul.f32 %v50, %v75
  %v80 = vmul.f32 %v55, %v75
  %v81 = vmul.f32 %v60, %v75
  %v82 = vmul.f32 %v65, %v75
  %v83 = vmul.f32 %v70, %v75
  %v84 = vlaneseq
  %v85 = vshrl.u32 %v84, 7
  %v86 = vsub.s32 0, %v85
  %v87 = vrot.slane %v18, %v86
  %v88 = vadd.f32 %v76, %v87
  %v89 = vadd.f32 %v77, %v87
  %v90 = vadd.f32 %v78, %v87
  %v91 = vadd.f32 %v79, %v87
  %v92 = vadd.f32 %v80, %v87
  %v93 = vadd.f32 %v81, %v87
  %v94 = vadd.f32 %v82, %v87
  %v95 = vadd.f32 %v83, %v87
  %v96 = vmax.f32 %v88, 0.0
  %v97 = vmax.f32 %v89, 0.0
  %v98 = vmax.f32 %v90, 0.0
  %v99 = vmax.f32 %v91, 0.0
  %v100 = vmax.f32 %v92, 0.0
  %v101 = vmax.f32 %v93, 0.0
  %v102 = vmax.f32 %v94, 0.0
  %v103 = vmax.f32 %v95, 0.0
  %v104 = vlaneseq
  %v105 = vshrl.u32 %v104, 7
  %v106 = vsub.s32 0, %v105
  %v107 = vrot.slane %v23, %v106
  %vm108 = vcmask 130048
  %v110 = vsel %vm108, %v96, 0
  %v113 = vsel %vm108, %v97, 0
  %v116 = vsel %vm108, %v98, 0
  %v119 = vsel %vm108, %v99, 0
  %v122 = vsel %vm108, %v100, 0
  %v125 = vsel %vm108, %v101, 0
  %v128 = vsel %vm108, %v102, 0
  %v131 = vsel %vm108, %v103, 0
  %133 = vmatprep.subr.mxu0 0.0
  %134 = vmatpush1.msra.mxu0 %v19
  %135 = vmatprep.subr.mxu0 0.0
  %136 = vmatpush1.msra.mxu0 %v20
  %137 = vmatprep.subr.mxu0 0.0
  %138 = vmatpush1.msra.mxu0 0.0
  %139 = vmatprep.subr.mxu0 0.0
  %140 = vmatpush1.msra.mxu0 0.0
  %141 = vmatprep.subr.mxu0 0.0
  %142 = vmatpush1.msra.mxu0 0.0
  %143 = vmatprep.subr.mxu0 0.0
  %144 = vmatpush1.msra.mxu0 0.0
  %145 = vmatprep.subr.mxu0 0.0
  %146 = vmatpush1.msra.mxu0 0.0
  %147 = vmatprep.subr.mxu0 0.0
  %148 = vmatpush1.msra.mxu0 0.0
  %149 = vmatprep.subr.mxu0 0.0
  %150 = vmatpush1.msra.mxu0 0.0
  %151 = vmatprep.subr.mxu0 0.0
  %152 = vmatpush1.msra.mxu0 0.0
  %153 = vmatprep.subr.mxu0 0.0
  %154 = vmatpush1.msra.mxu0 0.0
  %155 = vmatprep.subr.mxu0 0.0
  %156 = vmatpush1.msra.mxu0 0.0
  %157 = vmatprep.subr.mxu0 0.0
  %158 = vmatpush1.msra.mxu0 0.0
  %159 = vmatprep.subr.mxu0 0.0
  %160 = vmatpush1.msra.mxu0 0.0
  %161 = vmatprep.subr.mxu0 0.0
  %162 = vmatpush1.msra.mxu0 0.0
  %163 = vmatprep.subr.mxu0 0.0
  %164 = vmatpush1.msra.mxu0 0.0
  %165 = vmatprep.subr.mxu0 0.0
  %166 = vmatpush1.msra.mxu0 0.0
  %167 = vmatprep.subr.mxu0 0.0
  %168 = vmatpush1.msra.mxu0 0.0
  %169 = vmatprep.subr.mxu0 0.0
  %170 = vmatpush1.msra.mxu0 0.0
  %171 = vmatprep.subr.mxu0 0.0
  %172 = vmatpush1.msra.mxu0 0.0
  %173 = vmatprep.subr.mxu0 0.0
  %174 = vmatpush1.msra.mxu0 0.0
  %175 = vmatprep.subr.mxu0 0.0
  %176 = vmatpush1.msra.mxu0 0.0
  %177 = vmatprep.subr.mxu0 0.0
  %178 = vmatpush1.msra.mxu0 0.0
  %179 = vmatprep.subr.mxu0 0.0
  %180 = vmatpush1.msra.mxu0 0.0
  %181 = vmatprep.subr.mxu0 0.0
  %182 = vmatpush1.msra.mxu0 0.0
  %183 = vmatprep.subr.mxu0 0.0
  %184 = vmatpush1.msra.mxu0 0.0
  %185 = vmatprep.subr.mxu0 0.0
  %186 = vmatpush1.msra.mxu0 0.0
  %187 = vmatprep.subr.mxu0 0.0
  %188 = vmatpush1.msra.mxu0 0.0
  %189 = vmatprep.subr.mxu0 0.0
  %190 = vmatpush1.msra.mxu0 0.0
  %191 = vmatprep.subr.mxu0 0.0
  %192 = vmatpush1.msra.mxu0 0.0
  %193 = vmatprep.subr.mxu0 0.0
  %194 = vmatpush1.msra.mxu0 0.0
  %195 = vmatprep.subr.mxu0 0.0
  %196 = vmatpush1.msra.mxu0 0.0
  %197 = vmatprep.mubr.f32.mxu0 0.0
  %198 = vmatmul.mubr.f32.gmra.mrb[0].mxu0 %v110
  %v199 = vpop.f32.mrb[0].mxu0
  %v200 = vadd.f32 %v107, %v199
  %v201 = vpop.f32.mrb[0].mxu0
  %202 = vmatprep.mubr.f32.mxu0 0.0
  %203 = vmatmul.mubr.f32.gmra.mrb[0].mxu0 %v113
  %v204 = vpop.f32.mrb[0].mxu0
  %v205 = vadd.f32 %v107, %v204
  %v206 = vpop.f32.mrb[0].mxu0
  %207 = vmatprep.mubr.f32.mxu0 0.0
  %208 = vmatmul.mubr.f32.gmra.mrb[0].mxu0 %v116
  %v209 = vpop.f32.mrb[0].mxu0
  %v210 = vadd.f32 %v107, %v209
  %v211 = vpop.f32.mrb[0].mxu0
  %212 = vmatprep.mubr.f32.mxu0 0.0
  %213 = vmatmul.mubr.f32.gmra.mrb[0].mxu0 %v119
  %v214 = vpop.f32.mrb[0].mxu0
  %v215 = vadd.f32 %v107, %v214
  %v216 = vpop.f32.mrb[0].mxu0
  %217 = vmatprep.mubr.f32.mxu0 0.0
  %218 = vmatmul.mubr.f32.gmra.mrb[0].mxu0 %v122
  %v219 = vpop.f32.mrb[0].mxu0
  %v220 = vadd.f32 %v107, %v219
  %v221 = vpop.f32.mrb[0].mxu0
  %222 = vmatprep.mubr.f32.mxu0 0.0
  %223 = vmatmul.mubr.f32.gmra.mrb[0].mxu0 %v125
  %v224 = vpop.f32.mrb[0].mxu0
  %v225 = vadd.f32 %v107, %v224
  %v226 = vpop.f32.mrb[0].mxu0
  %227 = vmatprep.mubr.f32.mxu0 0.0
  %228 = vmatmul.mubr.f32.gmra.mrb[0].mxu0 %v128
  %v229 = vpop.f32.mrb[0].mxu0
  %v230 = vadd.f32 %v107, %v229
  %v231 = vpop.f32.mrb[0].mxu0
  %232 = vmatprep.mubr.f32.mxu0 0.0
  %233 = vmatmul.mubr.f32.gmra.mrb[0].mxu0 %v131
  %v234 = vpop.f32.mrb[0].mxu0
  %v235 = vadd.f32 %v107, %v234
  %v236 = vpop.f32.mrb[0].mxu0
  %237 = vdwg.mxu0
  %vm238 = vcmask 523264
  %239 = vst.msk [vmem:[#allocation2] sm:$0xff] %vm238, %v200
  %240 = vst.msk [vmem:[#allocation2 + $0x8] sm:$0xff] %vm238, %v205
  %241 = vst.msk [vmem:[#allocation2 + $0x10] sm:$0xff] %vm238, %v210
  %242 = vst.msk [vmem:[#allocation2 + $0x18] sm:$0xff] %vm238, %v215
  %243 = vst.msk [vmem:[#allocation2 + $0x20] sm:$0xff] %vm238, %v220
  %244 = vst.msk [vmem:[#allocation2 + $0x28] sm:$0xff] %vm238, %v225
  %245 = vst.msk [vmem:[#allocation2 + $0x30] sm:$0xff] %vm238, %v230
  %246 = vst.msk [vmem:[#allocation2 + $0x38] sm:$0xff] %vm238, %v235
  %v247 = vld [vmem:[#allocation2] sm:$0xff]
  %v249 = vsel %vm108, 0.0, 0
  %251 = vmatprep.subr.mxu0 0.0
  %252 = vmatpush1.msra.mxu0 %v21
  %253 = vmatprep.subr.mxu0 0.0
  %254 = vmatpush1.msra.mxu0 %v22
  %255 = vmatprep.subr.mxu0 0.0
  %256 = vmatpush1.msra.mxu0 0.0
  %257 = vmatprep.subr.mxu0 0.0
  %258 = vmatpush1.msra.mxu0 0.0
  %259 = vmatprep.subr.mxu0 0.0
  %260 = vmatpush1.msra.mxu0 0.0
  %261 = vmatprep.subr.mxu0 0.0
  %262 = vmatpush1.msra.mxu0 0.0
  %263 = vmatprep.subr.mxu0 0.0
  %264 = vmatpush1.msra.mxu0 0.0
  %265 = vmatprep.subr.mxu0 0.0
  %266 = vmatpush1.msra.mxu0 0.0
  %267 = vmatprep.subr.mxu0 0.0
  %268 = vmatpush1.msra.mxu0 0.0
  %269 = vmatprep.subr.mxu0 0.0
  %270 = vmatpush1.msra.mxu0 0.0
  %271 = vmatprep.subr.mxu0 0.0
  %272 = vmatpush1.msra.mxu0 0.0
  %273 = vmatprep.subr.mxu0 0.0
  %274 = vmatpush1.msra.mxu0 0.0
  %275 = vmatprep.subr.mxu0 0.0
  %276 = vmatpush1.msra.mxu0 0.0
  %277 = vmatprep.subr.mxu0 0.0
  %278 = vmatpush1.msra.mxu0 0.0
  %279 = vmatprep.subr.mxu0 0.0
  %280 = vmatpush1.msra.mxu0 0.0
  %281 = vmatprep.subr.mxu0 0.0
  %282 = vmatpush1.msra.mxu0 0.0
  %283 = vmatprep.subr.mxu0 0.0
  %284 = vmatpush1.msra.mxu0 0.0
  %285 = vmatprep.subr.mxu0 0.0
  %286 = vmatpush1.msra.mxu0 0.0
  %287 = vmatprep.subr.mxu0 0.0
  %288 = vmatpush1.msra.mxu0 0.0
  %289 = vmatprep.subr.mxu0 0.0
  %290 = vmatpush1.msra.mxu0 0.0
  %291 = vmatprep.subr.mxu0 0.0
  %292 = vmatpush1.msra.mxu0 0.0
  %293 = vmatprep.subr.mxu0 0.0
  %294 = vmatpush1.msra.mxu0 0.0
  %295 = vmatprep.subr.mxu0 0.0
  %296 = vmatpush1.msra.mxu0 0.0
  %297 = vmatprep.subr.mxu0 0.0
  %298 = vmatpush1.msra.mxu0 0.0
  %299 = vmatprep.subr.mxu0 0.0
  %300 = vmatpush1.msra.mxu0 0.0
  %301 = vmatprep.subr.mxu0 0.0
  %302 = vmatpush1.msra.mxu0 0.0
  %303 = vmatprep.subr.mxu0 0.0
  %304 = vmatpush1.msra.mxu0 0.0
  %305 = vmatprep.subr.mxu0 0.0
  %306 = vmatpush1.msra.mxu0 0.0
  %307 = vmatprep.subr.mxu0 0.0
  %308 = vmatpush1.msra.mxu0 0.0
  %309 = vmatprep.subr.mxu0 0.0
  %310 = vmatpush1.msra.mxu0 0.0
  %311 = vmatprep.subr.mxu0 0.0
  %312 = vmatpush1.msra.mxu0 0.0
  %313 = vmatprep.subr.mxu0 0.0
  %314 = vmatpush1.msra.mxu0 0.0
  %315 = vmatprep.mubr.f32.mxu0 0.0
  %316 = vmatmul.mubr.f32.gmra.mrb[0].mxu0 %v249
  %v317 = vpop.f32.mrb[0].mxu0
  %v318 = vadd.f32 0.0, %v317
  %v319 = vpop.f32.mrb[0].mxu0
  %320 = vdwg.mxu0
  %v321 = vadd.f32 %v247, %v318
  %v322 = vxor.u32 %v321, 2147483648
  %v323 = vmul.f32 %v322, 1.442695
  %v324 = vpow.pop %v323
  %v325 = vadd.f32 %v324, 1.0
  %v326 = vrcp.pop %v325
  %v327 = vmul.f32 1.0, %v326
  %v328 = vtanh.pop %v321
  %v329 = vmul.f32 %v327, 0.0
  %331 = vrot.lane.b32.xlu0 %v328, 96
  %v332 = vpop.permute.xlu0 %331
  %v334 = vmul.f32 %v327, %v332
  %336 = vrot.lane.b32.xlu0 %v334, 16
  %v337 = vpop.permute.xlu0 %336
  %v339 = vadd.f32 %v329, %v337
  %v340 = vtanh.pop %v339
  %342 = vrot.lane.b32.xlu0 %v340, 32
  %v343 = vpop.permute.xlu0 %342
  %v345 = vmul.f32 %v327, %v343
  %v346 = vld [vmem:[#allocation2 + $0x8] sm:$0xff]
  %348 = vrot.lane.b32.xlu0 %v345, 80
  %v349 = vpop.permute.xlu0 %348
  %v350 = vsel %vm108, %v349, 0
  %352 = vmatprep.subr.mxu0 0.0
  %353 = vmatpush1.msra.mxu0 %v21
  %354 = vmatprep.subr.mxu0 0.0
  %355 = vmatpush1.msra.mxu0 %v22
  %356 = vmatprep.subr.mxu0 0.0
  %357 = vmatpush1.msra.mxu0 0.0
  %358 = vmatprep.subr.mxu0 0.0
  %359 = vmatpush1.msra.mxu0 0.0
  %360 = vmatprep.subr.mxu0 0.0
  %361 = vmatpush1.msra.mxu0 0.0
  %362 = vmatprep.subr.mxu0 0.0
  %363 = vmatpush1.msra.mxu0 0.0
  %364 = vmatprep.subr.mxu0 0.0
  %365 = vmatpush1.msra.mxu0 0.0
  %366 = vmatprep.subr.mxu0 0.0
  %367 = vmatpush1.msra.mxu0 0.0
  %368 = vmatprep.subr.mxu0 0.0
  %369 = vmatpush1.msra.mxu0 0.0
  %370 = vmatprep.subr.mxu0 0.0
  %371 = vmatpush1.msra.mxu0 0.0
  %372 = vmatprep.subr.mxu0 0.0
  %373 = vmatpush1.msra.mxu0 0.0
  %374 = vmatprep.subr.mxu0 0.0
  %375 = vmatpush1.msra.mxu0 0.0
  %376 = vmatprep.subr.mxu0 0.0
  %377 = vmatpush1.msra.mxu0 0.0
  %378 = vmatprep.subr.mxu0 0.0
  %379 = vmatpush1.msra.mxu0 0.0
  %380 = vmatprep.subr.mxu0 0.0
  %381 = vmatpush1.msra.mxu0 0.0
  %382 = vmatprep.subr.mxu0 0.0
  %383 = vmatpush1.msra.mxu0 0.0
  %384 = vmatprep.subr.mxu0 0.0
  %385 = vmatpush1.msra.mxu0 0.0
  %386 = vmatprep.subr.mxu0 0.0
  %387 = vmatpush1.msra.mxu0 0.0
  %388 = vmatprep.subr.mxu0 0.0
  %389 = vmatpush1.msra.mxu0 0.0
  %390 = vmatprep.subr.mxu0 0.0
  %391 = vmatpush1.msra.mxu0 0.0
  %392 = vmatprep.subr.mxu0 0.0
  %393 = vmatpush1.msra.mxu0 0.0
  %394 = vmatprep.subr.mxu0 0.0
  %395 = vmatpush1.msra.mxu0 0.0
  %396 = vmatprep.subr.mxu0 0.0
  %397 = vmatpush1.msra.mxu0 0.0
  %398 = vmatprep.subr.mxu0 0.0
  %399 = vmatpush1.msra.mxu0 0.0
  %400 = vmatprep.subr.mxu0 0.0
  %401 = vmatpush1.msra.mxu0 0.0
  %402 = vmatprep.subr.mxu0 0.0
  %403 = vmatpush1.msra.mxu0 0.0
  %404 = vmatprep.subr.mxu0 0.0
  %405 = vmatpush1.msra.mxu0 0.0
  %406 = vmatprep.subr.mxu0 0.0
  %407 = vmatpush1.msra.mxu0 0.0
  %408 = vmatprep.subr.mxu0 0.0
  %409 = vmatpush1.msra.mxu0 0.0
  %410 = vmatprep.subr.mxu0 0.0
  %411 = vmatpush1.msra.mxu0 0.0
  %412 = vmatprep.subr.mxu0 0.0
  %413 = vmatpush1.msra.mxu0 0.0
  %414 = vmatprep.subr.mxu0 0.0
  %415 = vmatpush1.msra.mxu0 0.0
  %416 = vmatprep.mubr.f32.mxu0 0.0
  %417 = vmatmul.mubr.f32.gmra.mrb[0].mxu0 %v350
  %v418 = vpop.f32.mrb[0].mxu0
  %v419 = vadd.f32 0.0, %v418
  %v420 = vpop.f32.mrb[0].mxu0
  %421 = vdwg.mxu0
  %v422 = vadd.f32 %v346, %v419
  %v423 = vxor.u32 %v422, 2147483648
  %v424 = vmul.f32 %v423, 1.442695
  %v425 = vpow.pop %v424
  %v426 = vadd.f32 %v425, 1.0
  %v427 = vrcp.pop %v426
  %v428 = vmul.f32 1.0, %v427
  %v429 = vtanh.pop %v422
  %v430 = vmul.f32 %v428, %v339
  %432 = vrot.lane.b32.xlu0 %v429, 96
  %v433 = vpop.permute.xlu0 %432
  %v435 = vmul.f32 %v428, %v433
  %437 = vrot.lane.b32.xlu0 %v435, 16
  %v438 = vpop.permute.xlu0 %437
  %v440 = vadd.f32 %v430, %v438
  %v441 = vtanh.pop %v440
  %443 = vrot.lane.b32.xlu0 %v441, 32
  %v444 = vpop.permute.xlu0 %443
  %v446 = vmul.f32 %v428, %v444
  %v447 = vld [vmem:[#allocation2 + $0x10] sm:$0xff]
  %449 = vrot.lane.b32.xlu0 %v446, 80
  %v450 = vpop.permute.xlu0 %449
  %v451 = vsel %vm108, %v450, 0
  %453 = vmatprep.subr.mxu0 0.0
  %454 = vmatpush1.msra.mxu0 %v21
  %455 = vmatprep.subr.mxu0 0.0
  %456 = vmatpush1.msra.mxu0 %v22
  %457 = vmatprep.subr.mxu0 0.0
  %458 = vmatpush1.msra.mxu0 0.0
  %459 = vmatprep.subr.mxu0 0.0
  %460 = vmatpush1.msra.mxu0 0.0
  %461 = vmatprep.subr.mxu0 0.0
  %462 = vmatpush1.msra.mxu0 0.0
  %463 = vmatprep.subr.mxu0 0.0
  %464 = vmatpush1.msra.mxu0 0.0
  %465 = vmatprep.subr.mxu0 0.0
  %466 = vmatpush1.msra.mxu0 0.0
  %467 = vmatprep.subr.mxu0 0.0
  %468 = vmatpush1.msra.mxu0 0.0
  %469 = vmatprep.subr.mxu0 0.0
  %470 = vmatpush1.msra.mxu0 0.0
  %471 = vmatprep.subr.mxu0 0.0
  %472 = vmatpush1.msra.mxu0 0.0
  %473 = vmatprep.subr.mxu0 0.0
  %474 = vmatpush1.msra.mxu0 0.0
  %475 = vmatprep.subr.mxu0 0.0
  %476 = vmatpush1.msra.mxu0 0.0
  %477 = vmatprep.subr.mxu0 0.0
  %478 = vmatpush1.msra.mxu0 0.0
  %479 = vmatprep.subr.mxu0 0.0
  %480 = vmatpush1.msra.mxu0 0.0
  %481 = vmatprep.subr.mxu0 0.0
  %482 = vmatpush1.msra.mxu0 0.0
  %483 = vmatprep.subr.mxu0 0.0
  %484 = vmatpush1.msra.mxu0 0.0
  %485 = vmatprep.subr.mxu0 0.0
  %486 = vmatpush1.msra.mxu0 0.0
  %487 = vmatprep.subr.mxu0 0.0
  %488 = vmatpush1.msra.mxu0 0.0
  %489 = vmatprep.subr.mxu0 0.0
  %490 = vmatpush1.msra.mxu0 0.0
  %491 = vmatprep.subr.mxu0 0.0
  %492 = vmatpush1.msra.mxu0 0.0
  %493 = vmatprep.subr.mxu0 0.0
  %494 = vmatpush1.msra.mxu0 0.0
  %495 = vmatprep.subr.mxu0 0.0
  %496 = vmatpush1.msra.mxu0 0.0
  %497 = vmatprep.subr.mxu0 0.0
  %498 = vmatpush1.msra.mxu0 0.0
  %499 = vmatprep.subr.mxu0 0.0
  %500 = vmatpush1.msra.mxu0 0.0
  %501 = vmatprep.subr.mxu0 0.0
  %502 = vmatpush1.msra.mxu0 0.0
  %503 = vmatprep.subr.mxu0 0.0
  %504 = vmatpush1.msra.mxu0 0.0
  %505 = vmatprep.subr.mxu0 0.0
  %506 = vmatpush1.msra.mxu0 0.0
  %507 = vmatprep.subr.mxu0 0.0
  %508 = vmatpush1.msra.mxu0 0.0
  %509 = vmatprep.subr.mxu0 0.0
  %510 = vmatpush1.msra.mxu0 0.0
  %511 = vmatprep.subr.mxu0 0.0
  %512 = vmatpush1.msra.mxu0 0.0
  %513 = vmatprep.subr.mxu0 0.0
  %514 = vmatpush1.msra.mxu0 0.0
  %515 = vmatprep.subr.mxu0 0.0
  %516 = vmatpush1.msra.mxu0 0.0
  %517 = vmatprep.mubr.f32.mxu0 0.0
  %518 = vmatmul.mubr.f32.gmra.mrb[0].mxu0 %v451
  %v519 = vpop.f32.mrb[0].mxu0
  %v520 = vadd.f32 0.0, %v519
  %v521 = vpop.f32.mrb[0].mxu0
  %522 = vdwg.mxu0
  %v523 = vadd.f32 %v447, %v520
  %v524 = vxor.u32 %v523, 2147483648
  %v525 = vmul.f32 %v524, 1.442695
  %v526 = vpow.pop %v525
  %v527 = vadd.f32 %v526, 1.0
  %v528 = vrcp.pop %v527
  %v529 = vmul.f32 1.0, %v528
  %v530 = vtanh.pop %v523
  %v531 = vmul.f32 %v529, %v440
  %533 = vrot.lane.b32.xlu0 %v530, 96
  %v534 = vpop.permute.xlu0 %533
  %v536 = vmul.f32 %v529, %v534
  %538 = vrot.lane.b32.xlu0 %v536, 16
  %v539 = vpop.permute.xlu0 %538
  %v541 = vadd.f32 %v531, %v539
  %v542 = vtanh.pop %v541
  %544 = vrot.lane.b32.xlu0 %v542, 32
  %v545 = vpop.permute.xlu0 %544
  %v547 = vmul.f32 %v529, %v545
  %v548 = vld [vmem:[#allocation2 + $0x18] sm:$0xff]
  %550 = vrot.lane.b32.xlu0 %v547, 80
  %v551 = vpop.permute.xlu0 %550
  %v552 = vsel %vm108, %v551, 0
  %554 = vmatprep.subr.mxu0 0.0
  %555 = vmatpush1.msra.mxu0 %v21
  %556 = vmatprep.subr.mxu0 0.0
  %557 = vmatpush1.msra.mxu0 %v22
  %558 = vmatprep.subr.mxu0 0.0
  %559 = vmatpush1.msra.mxu0 0.0
  %560 = vmatprep.subr.mxu0 0.0
  %561 = vmatpush1.msra.mxu0 0.0
  %562 = vmatprep.subr.mxu0 0.0
  %563 = vmatpush1.msra.mxu0 0.0
  %564 = vmatprep.subr.mxu0 0.0
  %565 = vmatpush1.msra.mxu0 0.0
  %566 = vmatprep.subr.mxu0 0.0
  %567 = vmatpush1.msra.mxu0 0.0
  %568 = vmatprep.subr.mxu0 0.0
  %569 = vmatpush1.msra.mxu0 0.0
  %570 = vmatprep.subr.mxu0 0.0
  %571 = vmatpush1.msra.mxu0 0.0
  %572 = vmatprep.subr.mxu0 0.0
  %573 = vmatpush1.msra.mxu0 0.0
  %574 = vmatprep.subr.mxu0 0.0
  %575 = vmatpush1.msra.mxu0 0.0
  %576 = vmatprep.subr.mxu0 0.0
  %577 = vmatpush1.msra.mxu0 0.0
  %578 = vmatprep.subr.mxu0 0.0
  %579 = vmatpush1.msra.mxu0 0.0
  %580 = vmatprep.subr.mxu0 0.0
  %581 = vmatpush1.msra.mxu0 0.0
  %582 = vmatprep.subr.mxu0 0.0
  %583 = vmatpush1.msra.mxu0 0.0
  %584 = vmatprep.subr.mxu0 0.0
  %585 = vmatpush1.msra.mxu0 0.0
  %586 = vmatprep.subr.mxu0 0.0
  %587 = vmatpush1.msra.mxu0 0.0
  %588 = vmatprep.subr.mxu0 0.0
  %589 = vmatpush1.msra.mxu0 0.0
  %590 = vmatprep.subr.mxu0 0.0
  %591 = vmatpush1.msra.mxu0 0.0
  %592 = vmatprep.subr.mxu0 0.0
  %593 = vmatpush1.msra.mxu0 0.0
  %594 = vmatprep.subr.mxu0 0.0
  %595 = vmatpush1.msra.mxu0 0.0
  %596 = vmatprep.subr.mxu0 0.0
  %597 = vmatpush1.msra.mxu0 0.0
  %598 = vmatprep.subr.mxu0 0.0
  %599 = vmatpush1.msra.mxu0 0.0
  %600 = vmatprep.subr.mxu0 0.0
  %601 = vmatpush1.msra.mxu0 0.0
  %602 = vmatprep.subr.mxu0 0.0
  %603 = vmatpush1.msra.mxu0 0.0
  %604 = vmatprep.subr.mxu0 0.0
  %605 = vmatpush1.msra.mxu0 0.0
  %606 = vmatprep.subr.mxu0 0.0
  %607 = vmatpush1.msra.mxu0 0.0
  %608 = vmatprep.subr.mxu0 0.0
  %609 = vmatpush1.msra.mxu0 0.0
  %610 = vmatprep.subr.mxu0 0.0
  %611 = vmatpush1.msra.mxu0 0.0
  %612 = vmatprep.subr.mxu0 0.0
  %613 = vmatpush1.msra.mxu0 0.0
  %614 = vmatprep.subr.mxu0 0.0
  %615 = vmatpush1.msra.mxu0 0.0
  %616 = vmatprep.subr.mxu0 0.0
  %617 = vmatpush1.msra.mxu0 0.0
  %618 = vmatprep.mubr.f32.mxu0 0.0
  %619 = vmatmul.mubr.f32.gmra.mrb[0].mxu0 %v552
  %v620 = vpop.f32.mrb[0].mxu0
  %v621 = vadd.f32 0.0, %v620
  %v622 = vpop.f32.mrb[0].mxu0
  %623 = vdwg.mxu0
  %v624 = vadd.f32 %v548, %v621
  %v625 = vxor.u32 %v624, 2147483648
  %v626 = vmul.f32 %v625, 1.442695
  %v627 = vpow.pop %v626
  %v628 = vadd.f32 %v627, 1.0
  %v629 = vrcp.pop %v628
  %v630 = vmul.f32 1.0, %v629
  %v631 = vtanh.pop %v624
  %v632 = vmul.f32 %v630, %v541
  %634 = vrot.lane.b32.xlu0 %v631, 96
  %v635 = vpop.permute.xlu0 %634
  %v637 = vmul.f32 %v630, %v635
  %639 = vrot.lane.b32.xlu0 %v637, 16
  %v640 = vpop.permute.xlu0 %639
  %v642 = vadd.f32 %v632, %v640
  %v643 = vtanh.pop %v642
  %645 = vrot.lane.b32.xlu0 %v643, 32
  %v646 = vpop.permute.xlu0 %645
  %v648 = vmul.f32 %v630, %v646
  %v649 = vld [vmem:[#allocation2 + $0x20] sm:$0xff]
  %651 = vrot.lane.b32.xlu0 %v648, 80
  %v652 = vpop.permute.xlu0 %651
  %v653 = vsel %vm108, %v652, 0
  %655 = vmatprep.subr.mxu0 0.0
  %656 = vmatpush1.msra.mxu0 %v21
  %657 = vmatprep.subr.mxu0 0.0
  %658 = vmatpush1.msra.mxu0 %v22
  %659 = vmatprep.subr.mxu0 0.0
  %660 = vmatpush1.msra.mxu0 0.0
  %661 = vmatprep.subr.mxu0 0.0
  %662 = vmatpush1.msra.mxu0 0.0
  %663 = vmatprep.subr.mxu0 0.0
  %664 = vmatpush1.msra.mxu0 0.0
  %665 = vmatprep.subr.mxu0 0.0
  %666 = vmatpush1.msra.mxu0 0.0
  %667 = vmatprep.subr.mxu0 0.0
  %668 = vmatpush1.msra.mxu0 0.0
  %669 = vmatprep.subr.mxu0 0.0
  %670 = vmatpush1.msra.mxu0 0.0
  %671 = vmatprep.subr.mxu0 0.0
  %672 = vmatpush1.msra.mxu0 0.0
  %673 = vmatprep.subr.mxu0 0.0
  %674 = vmatpush1.msra.mxu0 0.0
  %675 = vmatprep.subr.mxu0 0.0
  %676 = vmatpush1.msra.mxu0 0.0
  %677 = vmatprep.subr.mxu0 0.0
  %678 = vmatpush1.msra.mxu0 0.0
  %679 = vmatprep.subr.mxu0 0.0
  %680 = vmatpush1.msra.mxu0 0.0
  %681 = vmatprep.subr.mxu0 0.0
  %682 = vmatpush1.msra.mxu0 0.0
  %683 = vmatprep.subr.mxu0 0.0
  %684 = vmatpush1.msra.mxu0 0.0
  %685 = vmatprep.subr.mxu0 0.0
  %686 = vmatpush1.msra.mxu0 0.0
  %687 = vmatprep.subr.mxu0 0.0
  %688 = vmatpush1.msra.mxu0 0.0
  %689 = vmatprep.subr.mxu0 0.0
  %690 = vmatpush1.msra.mxu0 0.0
  %691 = vmatprep.subr.mxu0 0.0
  %692 = vmatpush1.msra.mxu0 0.0
  %693 = vmatprep.subr.mxu0 0.0
  %694 = vmatpush1.msra.mxu0 0.0
  %695 = vmatprep.subr.mxu0 0.0
  %696 = vmatpush1.msra.mxu0 0.0
  %697 = vmatprep.subr.mxu0 0.0
  %698 = vmatpush1.msra.mxu0 0.0
  %699 = vmatprep.subr.mxu0 0.0
  %700 = vmatpush1.msra.mxu0 0.0
  %701 = vmatprep.subr.mxu0 0.0
  %702 = vmatpush1.msra.mxu0 0.0
  %703 = vmatprep.subr.mxu0 0.0
  %704 = vmatpush1.msra.mxu0 0.0
  %705 = vmatprep.subr.mxu0 0.0
  %706 = vmatpush1.msra.mxu0 0.0
  %707 = vmatprep.subr.mxu0 0.0
  %708 = vmatpush1.msra.mxu0 0.0
  %709 = vmatprep.subr.mxu0 0.0
  %710 = vmatpush1.msra.mxu0 0.0
  %711 = vmatprep.subr.mxu0 0.0
  %712 = vmatpush1.msra.mxu0 0.0
  %713 = vmatprep.subr.mxu0 0.0
  %714 = vmatpush1.msra.mxu0 0.0
  %715 = vmatprep.subr.mxu0 0.0
  %716 = vmatpush1.msra.mxu0 0.0
  %717 = vmatprep.subr.mxu0 0.0
  %718 = vmatpush1.msra.mxu0 0.0
  %719 = vmatprep.mubr.f32.mxu0 0.0
  %720 = vmatmul.mubr.f32.gmra.mrb[0].mxu0 %v653
  %v721 = vpop.f32.mrb[0].mxu0
  %v722 = vadd.f32 0.0, %v721
  %v723 = vpop.f32.mrb[0].mxu0
  %724 = vdwg.mxu0
  %v725 = vadd.f32 %v649, %v722
  %v726 = vxor.u32 %v725, 2147483648
  %v727 = vmul.f32 %v726, 1.442695
  %v728 = vpow.pop %v727
  %v729 = vadd.f32 %v728, 1.0
  %v730 = vrcp.pop %v729
  %v731 = vmul.f32 1.0, %v730
  %v732 = vtanh.pop %v725
  %v733 = vmul.f32 %v731, %v642
  %735 = vrot.lane.b32.xlu0 %v732, 96
  %v736 = vpop.permute.xlu0 %735
  %v738 = vmul.f32 %v731, %v736
  %740 = vrot.lane.b32.xlu0 %v738, 16
  %v741 = vpop.permute.xlu0 %740
  %v743 = vadd.f32 %v733, %v741
  %v744 = vtanh.pop %v743
  %746 = vrot.lane.b32.xlu0 %v744, 32
  %v747 = vpop.permute.xlu0 %746
  %v749 = vmul.f32 %v731, %v747
  %v750 = vld [vmem:[#allocation2 + $0x28] sm:$0xff]
  %752 = vrot.lane.b32.xlu0 %v749, 80
  %v753 = vpop.permute.xlu0 %752
  %v754 = vsel %vm108, %v753, 0
  %756 = vmatprep.subr.mxu0 0.0
  %757 = vmatpush1.msra.mxu0 %v21
  %758 = vmatprep.subr.mxu0 0.0
  %759 = vmatpush1.msra.mxu0 %v22
  %760 = vmatprep.subr.mxu0 0.0
  %761 = vmatpush1.msra.mxu0 0.0
  %762 = vmatprep.subr.mxu0 0.0
  %763 = vmatpush1.msra.mxu0 0.0
  %764 = vmatprep.subr.mxu0 0.0
  %765 = vmatpush1.msra.mxu0 0.0
  %766 = vmatprep.subr.mxu0 0.0
  %767 = vmatpush1.msra.mxu0 0.0
  %768 = vmatprep.subr.mxu0 0.0
  %769 = vmatpush1.msra.mxu0 0.0
  %770 = vmatprep.subr.mxu0 0.0
  %771 = vmatpush1.msra.mxu0 0.0
  %772 = vmatprep.subr.mxu0 0.0
  %773 = vmatpush1.msra.mxu0 0.0
  %774 = vmatprep.subr.mxu0 0.0
  %775 = vmatpush1.msra.mxu0 0.0
  %776 = vmatprep.subr.mxu0 0.0
  %777 = vmatpush1.msra.mxu0 0.0
  %778 = vmatprep.subr.mxu0 0.0
  %779 = vmatpush1.msra.mxu0 0.0
  %780 = vmatprep.subr.mxu0 0.0
  %781 = vmatpush1.msra.mxu0 0.0
  %782 = vmatprep.subr.mxu0 0.0
  %783 = vmatpush1.msra.mxu0 0.0
  %784 = vmatprep.subr.mxu0 0.0
  %785 = vmatpush1.msra.mxu0 0.0
  %786 = vmatprep.subr.mxu0 0.0
  %787 = vmatpush1.msra.mxu0 0.0
  %788 = vmatprep.subr.mxu0 0.0
  %789 = vmatpush1.msra.mxu0 0.0
  %790 = vmatprep.subr.mxu0 0.0
  %791 = vmatpush1.msra.mxu0 0.0
  %792 = vmatprep.subr.mxu0 0.0
  %793 = vmatpush1.msra.mxu0 0.0
  %794 = vmatprep.subr.mxu0 0.0
  %795 = vmatpush1.msra.mxu0 0.0
  %796 = vmatprep.subr.mxu0 0.0
  %797 = vmatpush1.msra.mxu0 0.0
  %798 = vmatprep.subr.mxu0 0.0
  %799 = vmatpush1.msra.mxu0 0.0
  %800 = vmatprep.subr.mxu0 0.0
  %801 = vmatpush1.msra.mxu0 0.0
  %802 = vmatprep.subr.mxu0 0.0
  %803 = vmatpush1.msra.mxu0 0.0
  %804 = vmatprep.subr.mxu0 0.0
  %805 = vmatpush1.msra.mxu0 0.0
  %806 = vmatprep.subr.mxu0 0.0
  %807 = vmatpush1.msra.mxu0 0.0
  %808 = vmatprep.subr.mxu0 0.0
  %809 = vmatpush1.msra.mxu0 0.0
  %810 = vmatprep.subr.mxu0 0.0
  %811 = vmatpush1.msra.mxu0 0.0
  %812 = vmatprep.subr.mxu0 0.0
  %813 = vmatpush1.msra.mxu0 0.0
  %814 = vmatprep.subr.mxu0 0.0
  %815 = vmatpush1.msra.mxu0 0.0
  %816 = vmatprep.subr.mxu0 0.0
  %817 = vmatpush1.msra.mxu0 0.0
  %818 = vmatprep.subr.mxu0 0.0
  %819 = vmatpush1.msra.mxu0 0.0
  %820 = vmatprep.mubr.f32.mxu0 0.0
  %821 = vmatmul.mubr.f32.gmra.mrb[0].mxu0 %v754
  %v822 = vpop.f32.mrb[0].mxu0
  %v823 = vadd.f32 0.0, %v822
  %v824 = vpop.f32.mrb[0].mxu0
  %825 = vdwg.mxu0
  %v826 = vadd.f32 %v750, %v823
  %v827 = vxor.u32 %v826, 2147483648
  %v828 = vmul.f32 %v827, 1.442695
  %v829 = vpow.pop %v828
  %v830 = vadd.f32 %v829, 1.0
  %v831 = vrcp.pop %v830
  %v832 = vmul.f32 1.0, %v831
  %v833 = vtanh.pop %v826
  %v834 = vmul.f32 %v832, %v743
  %836 = vrot.lane.b32.xlu0 %v833, 96
  %v837 = vpop.permute.xlu0 %836
  %v839 = vmul.f32 %v832, %v837
  %841 = vrot.lane.b32.xlu0 %v839, 16
  %v842 = vpop.permute.xlu0 %841
  %v844 = vadd.f32 %v834, %v842
  %v845 = vtanh.pop %v844
  %847 = vrot.lane.b32.xlu0 %v845, 32
  %v848 = vpop.permute.xlu0 %847
  %v850 = vmul.f32 %v832, %v848
  %v851 = vld [vmem:[#allocation2 + $0x30] sm:$0xff]
  %853 = vrot.lane.b32.xlu0 %v850, 80
  %v854 = vpop.permute.xlu0 %853
  %v855 = vsel %vm108, %v854, 0
  %857 = vmatprep.subr.mxu0 0.0
  %858 = vmatpush1.msra.mxu0 %v21
  %859 = vmatprep.subr.mxu0 0.0
  %860 = vmatpush1.msra.mxu0 %v22
  %861 = vmatprep.subr.mxu0 0.0
  %862 = vmatpush1.msra.mxu0 0.0
  %863 = vmatprep.subr.mxu0 0.0
  %864 = vmatpush1.msra.mxu0 0.0
  %865 = vmatprep.subr.mxu0 0.0
  %866 = vmatpush1.msra.mxu0 0.0
  %867 = vmatprep.subr.mxu0 0.0
  %868 = vmatpush1.msra.mxu0 0.0
  %869 = vmatprep.subr.mxu0 0.0
  %870 = vmatpush1.msra.mxu0 0.0
  %871 = vmatprep.subr.mxu0 0.0
  %872 = vmatpush1.msra.mxu0 0.0
  %873 = vmatprep.subr.mxu0 0.0
  %874 = vmatpush1.msra.mxu0 0.0
  %875 = vmatprep.subr.mxu0 0.0
  %876 = vmatpush1.msra.mxu0 0.0
  %877 = vmatprep.subr.mxu0 0.0
  %878 = vmatpush1.msra.mxu0 0.0
  %879 = vmatprep.subr.mxu0 0.0
  %880 = vmatpush1.msra.mxu0 0.0
  %881 = vmatprep.subr.mxu0 0.0
  %882 = vmatpush1.msra.mxu0 0.0
  %883 = vmatprep.subr.mxu0 0.0
  %884 = vmatpush1.msra.mxu0 0.0
  %885 = vmatprep.subr.mxu0 0.0
  %886 = vmatpush1.msra.mxu0 0.0
  %887 = vmatprep.subr.mxu0 0.0
  %888 = vmatpush1.msra.mxu0 0.0
  %889 = vmatprep.subr.mxu0 0.0
  %890 = vmatpush1.msra.mxu0 0.0
  %891 = vmatprep.subr.mxu0 0.0
  %892 = vmatpush1.msra.mxu0 0.0
  %893 = vmatprep.subr.mxu0 0.0
  %894 = vmatpush1.msra.mxu0 0.0
  %895 = vmatprep.subr.mxu0 0.0
  %896 = vmatpush1.msra.mxu0 0.0
  %897 = vmatprep.subr.mxu0 0.0
  %898 = vmatpush1.msra.mxu0 0.0
  %899 = vmatprep.subr.mxu0 0.0
  %900 = vmatpush1.msra.mxu0 0.0
  %901 = vmatprep.subr.mxu0 0.0
  %902 = vmatpush1.msra.mxu0 0.0
  %903 = vmatprep.subr.mxu0 0.0
  %904 = vmatpush1.msra.mxu0 0.0
  %905 = vmatprep.subr.mxu0 0.0
  %906 = vmatpush1.msra.mxu0 0.0
  %907 = vmatprep.subr.mxu0 0.0
  %908 = vmatpush1.msra.mxu0 0.0
  %909 = vmatprep.subr.mxu0 0.0
  %910 = vmatpush1.msra.mxu0 0.0
  %911 = vmatprep.subr.mxu0 0.0
  %912 = vmatpush1.msra.mxu0 0.0
  %913 = vmatprep.subr.mxu0 0.0
  %914 = vmatpush1.msra.mxu0 0.0
  %915 = vmatprep.subr.mxu0 0.0
  %916 = vmatpush1.msra.mxu0 0.0
  %917 = vmatprep.subr.mxu0 0.0
  %918 = vmatpush1.msra.mxu0 0.0
  %919 = vmatprep.subr.mxu0 0.0
  %920 = vmatpush1.msra.mxu0 0.0
  %921 = vmatprep.mubr.f32.mxu0 0.0
  %922 = vmatmul.mubr.f32.gmra.mrb[0].mxu0 %v855
  %v923 = vpop.f32.mrb[0].mxu0
  %v924 = vadd.f32 0.0, %v923
  %v925 = vpop.f32.mrb[0].mxu0
  %926 = vdwg.mxu0
  %v927 = vadd.f32 %v851, %v924
  %v928 = vxor.u32 %v927, 2147483648
  %v929 = vmul.f32 %v928, 1.442695
  %v930 = vpow.pop %v929
  %v931 = vadd.f32 %v930, 1.0
  %v932 = vrcp.pop %v931
  %v933 = vmul.f32 1.0, %v932
  %v934 = vtanh.pop %v927
  %v935 = vmul.f32 %v933, %v844
  %937 = vrot.lane.b32.xlu0 %v934, 96
  %v938 = vpop.permute.xlu0 %937
  %v940 = vmul.f32 %v933, %v938
  %942 = vrot.lane.b32.xlu0 %v940, 16
  %v943 = vpop.permute.xlu0 %942
  %v945 = vadd.f32 %v935, %v943
  %v946 = vtanh.pop %v945
  %948 = vrot.lane.b32.xlu0 %v946, 32
  %v949 = vpop.permute.xlu0 %948
  %v951 = vmul.f32 %v933, %v949
  %v952 = vld [vmem:[#allocation2 + $0x38] sm:$0xff]
  %954 = vrot.lane.b32.xlu0 %v951, 80
  %v955 = vpop.permute.xlu0 %954
  %v956 = vsel %vm108, %v955, 0
  %958 = vmatprep.subr.mxu0 0.0
  %959 = vmatpush1.msra.mxu0 %v21
  %960 = vmatprep.subr.mxu0 0.0
  %961 = vmatpush1.msra.mxu0 %v22
  %962 = vmatprep.subr.mxu0 0.0
  %963 = vmatpush1.msra.mxu0 0.0
  %964 = vmatprep.subr.mxu0 0.0
  %965 = vmatpush1.msra.mxu0 0.0
  %966 = vmatprep.subr.mxu0 0.0
  %967 = vmatpush1.msra.mxu0 0.0
  %968 = vmatprep.subr.mxu0 0.0
  %969 = vmatpush1.msra.mxu0 0.0
  %970 = vmatprep.subr.mxu0 0.0
  %971 = vmatpush1.msra.mxu0 0.0
  %972 = vmatprep.subr.mxu0 0.0
  %973 = vmatpush1.msra.mxu0 0.0
  %974 = vmatprep.subr.mxu0 0.0
  %975 = vmatpush1.msra.mxu0 0.0
  %976 = vmatprep.subr.mxu0 0.0
  %977 = vmatpush1.msra.mxu0 0.0
  %978 = vmatprep.subr.mxu0 0.0
  %979 = vmatpush1.msra.mxu0 0.0
  %980 = vmatprep.subr.mxu0 0.0
  %981 = vmatpush1.msra.mxu0 0.0
  %982 = vmatprep.subr.mxu0 0.0
  %983 = vmatpush1.msra.mxu0 0.0
  %984 = vmatprep.subr.mxu0 0.0
  %985 = vmatpush1.msra.mxu0 0.0
  %986 = vmatprep.subr.mxu0 0.0
  %987 = vmatpush1.msra.mxu0 0.0
  %988 = vmatprep.subr.mxu0 0.0
  %989 = vmatpush1.msra.mxu0 0.0
  %990 = vmatprep.subr.mxu0 0.0
  %991 = vmatpush1.msra.mxu0 0.0
  %992 = vmatprep.subr.mxu0 0.0
  %993 = vmatpush1.msra.mxu0 0.0
  %994 = vmatprep.subr.mxu0 0.0
  %995 = vmatpush1.msra.mxu0 0.0
  %996 = vmatprep.subr.mxu0 0.0
  %997 = vmatpush1.msra.mxu0 0.0
  %998 = vmatprep.subr.mxu0 0.0
  %999 = vmatpush1.msra.mxu0 0.0
  %1000 = vmatprep.subr.mxu0 0.0
  %1001 = vmatpush1.msra.mxu0 0.0
  %1002 = vmatprep.subr.mxu0 0.0
  %1003 = vmatpush1.msra.mxu0 0.0
  %1004 = vmatprep.subr.mxu0 0.0
  %1005 = vmatpush1.msra.mxu0 0.0
  %1006 = vmatprep.subr.mxu0 0.0
  %1007 = vmatpush1.msra.mxu0 0.0
  %1008 = vmatprep.subr.mxu0 0.0
  %1009 = vmatpush1.msra.mxu0 0.0
  %1010 = vmatprep.subr.mxu0 0.0
  %1011 = vmatpush1.msra.mxu0 0.0
  %1012 = vmatprep.subr.mxu0 0.0
  %1013 = vmatpush1.msra.mxu0 0.0
  %1014 = vmatprep.subr.mxu0 0.0
  %1015 = vmatpush1.msra.mxu0 0.0
  %1016 = vmatprep.subr.mxu0 0.0
  %1017 = vmatpush1.msra.mxu0 0.0
  %1018 = vmatprep.subr.mxu0 0.0
  %1019 = vmatpush1.msra.mxu0 0.0
  %1020 = vmatprep.subr.mxu0 0.0
  %1021 = vmatpush1.msra.mxu0 0.0
  %1022 = vmatprep.mubr.f32.mxu0 0.0
  %1023 = vmatmul.mubr.f32.gmra.mrb[0].mxu0 %v956
  %v1024 = vpop.f32.mrb[0].mxu0
  %v1025 = vadd.f32 0.0, %v1024
  %v1026 = vpop.f32.mrb[0].mxu0
  %1027 = vdwg.mxu0
  %v1028 = vadd.f32 %v952, %v1025
  %v1029 = vxor.u32 %v1028, 2147483648
  %v1030 = vmul.f32 %v1029, 1.442695
  %v1031 = vpow.pop %v1030
  %v1032 = vadd.f32 %v1031, 1.0
  %v1033 = vrcp.pop %v1032
  %v1034 = vmul.f32 1.0, %v1033
  %v1035 = vtanh.pop %v1028
  %v1036 = vmul.f32 %v1034, %v945
  %1038 = vrot.lane.b32.xlu0 %v1035, 96
  %v1039 = vpop.permute.xlu0 %1038
  %v1041 = vmul.f32 %v1034, %v1039
  %1043 = vrot.lane.b32.xlu0 %v1041, 16
  %v1044 = vpop.permute.xlu0 %1043
  %v1046 = vadd.f32 %v1036, %v1044
  %v1047 = vtanh.pop %v1046
  %1049 = vrot.lane.b32.xlu0 %v1047, 32
  %v1050 = vpop.permute.xlu0 %1049
  %v1052 = vmul.f32 %v1034, %v1050
  %v1053 = vld [vmem:[%s3 + $0x1] sm:$0x1]
  %v1054 = vld [vmem:[%s3 + $0x2] sm:$0x1]
  %v1055 = vlaneseq
  %v1056 = vshrl.u32 %v1055, 7
  %v1057 = vsub.s32 0, %v1056
  %v1058 = vrot.slane %v1053, %v1057
  %1060 = vrot.lane.b32.xlu0 %v1058, 48
  %v1061 = vpop.permute.xlu0 %1060
  %v1063 = vmul.f32 %v1052, %v1061
  %1065 = vrot.lane.b32.xlu0 %v1063, 80
  %v1066 = vpop.permute.xlu0 %1065
  %v1068 = vsel %vm108, %v1066, 0.0
  %1069 = vadd.xlane.f32.xlu0 %v1068
  %v1070 = vpop.xlane.xlu0 %1069
  %v1071 = vlaneseq
  %v1072 = vshrl.u32 %v1071, 7
  %v1073 = vsub.s32 0, %v1072
  %v1074 = vrot.slane %v1054, %v1073
  %v1075 = vadd.f32 %v1070, %v1074
  %vm1076 = vcmask 7168
  %1077 = vst.msk [vmem:[%s4] sm:$0xff] %vm1076, %v1075
  // Predicated region
  $region18: #{lstm_lightweight_forward.1} parent=0 // pred_check
    _
  $region19: #{lstm_lightweight_forward.1} parent=0 // pred_check_branch
    %1079 = sbr.rel (0) target = $region21
  $region20: #{lstm_lightweight_forward.1} parent=0 // pred_region
    _
  $region21: #{lstm_lightweight_forward.1} parent=0 // pred_fallthru
    _
  // Predicated region
  $region22: #{lstm_lightweight_forward.1} parent=0 // pred_check
    _
  $region23: #{lstm_lightweight_forward.1} parent=0 // pred_check_branch
    %1081 = sbr.rel (0) target = $region25
  $region24: #{lstm_lightweight_forward.1} parent=0 // pred_region
    _
  $region25: #{lstm_lightweight_forward.1} parent=0 // pred_fallthru
    _

</llo_original>
